<compile_context>
chip_gen: v7x
topology: tpu7x:2x2x1
jax: 0.10.0
libtpu: 0.0.40
codegen_flags: <defaults>
</compile_context>

<pallas_src>
import functools

import jax
import jax.numpy as jnp
from jax.experimental import pallas as pl
from jax.experimental.pallas import tpu as pltpu


def _ncf_kernel(num_layers, eu_ref, ei_ref, *refs):
    """MLP tower + predict layer + sigmoid, feature-major activations.

    refs layout (after eu_ref, ei_ref):
      refs[0], refs[1], refs[2] : W1_user (h1, emb), W1_item (h1, emb), b1 (h1, 1)
      refs[3 + 2*i], refs[4+2*i]: W_{i+2} (out, in), b_{i+2} (out, 1)   for i in range(num_layers-1)
      refs[-3], refs[-2]        : w_pred (factor_num, 1), b_pred (1, 1)
      refs[-1]                  : out (1, TILE_B)
    """
    out_ref = refs[-1]
    w_refs = refs[:-1]

    w1u = w_refs[0][...]          # bf16 (h1, emb)
    w1i = w_refs[1][...]          # bf16 (h1, emb)
    b1 = w_refs[2][...]           # f32  (h1, 1)

    # First layer: concat is fused away by splitting W1.
    h = jnp.dot(w1u, eu_ref[...], preferred_element_type=jnp.float32)
    h = h + jnp.dot(w1i, ei_ref[...], preferred_element_type=jnp.float32)
    h = jnp.maximum(h + b1, 0.0)                      # f32 (h1, TILE_B)

    idx = 3
    for _ in range(num_layers - 1):
        w = w_refs[idx][...]                          # bf16 (out, in)
        b = w_refs[idx + 1][...]                      # f32  (out, 1)
        idx += 2
        h = jnp.dot(w, h.astype(w.dtype), preferred_element_type=jnp.float32)
        h = jnp.maximum(h + b, 0.0)

    wp = w_refs[idx][...]                             # f32 (factor_num, 1)
    bp = w_refs[idx + 1][...]                         # f32 (1, 1)
    # N=1 predict layer as VPU multiply + sublane reduce (MXU would be <1% utilized).
    logit = jnp.sum(h * wp, axis=0, keepdims=True) + bp   # (1, TILE_B)
    out_ref[...] = jax.nn.sigmoid(logit)


def ncf_forward(params, user_idx, item_idx, *, max_tile_b=1024,
                dot_dtype=jnp.bfloat16):
    """NCF MLP-branch forward. Returns sigmoid predictions of shape (batch,)."""
    embed_user_t = params["embed_user_t"]   # (emb_dim, user_num)  feature-major table
    embed_item_t = params["embed_item_t"]   # (emb_dim, item_num)
    mlp_weights = params["mlp_weights"]     # list of (out, in)  (torch-native layout)
    mlp_biases = params["mlp_biases"]       # list of (out,)
    w_pred = params["w_pred"]               # (1, factor_num)
    b_pred = params["b_pred"]               # (1,)

    num_layers = len(mlp_weights)
    emb = embed_user_t.shape[0]
    batch = user_idx.shape[0]

    # Large batch tiles (multiple of 128 lanes); pad the tail tile with index 0
    # so no garbage rows are read, then slice the result back to `batch`.
    tile_b = min(max_tile_b, ((batch + 127) // 128) * 128)
    b_pad = pl.cdiv(batch, tile_b) * tile_b
    if b_pad != batch:
        pad = b_pad - batch
        user_idx = jnp.pad(user_idx, (0, pad))
        item_idx = jnp.pad(item_idx, (0, pad))

    # Embedding gather (plain-JAX glue) directly into feature-major layout; no concat.
    eu_t = jnp.take(embed_user_t, user_idx, axis=1).astype(dot_dtype)  # (emb, b_pad)
    ei_t = jnp.take(embed_item_t, item_idx, axis=1).astype(dot_dtype)  # (emb, b_pad)

    w1 = mlp_weights[0].astype(dot_dtype)              # (h1, 2*emb)
    operands = [
        eu_t, ei_t,
        w1[:, :emb], w1[:, emb:],
        mlp_biases[0].reshape(-1, 1).astype(jnp.float32),
    ]
    for wgt, bia in zip(mlp_weights[1:], mlp_biases[1:]):
        operands.append(wgt.astype(dot_dtype))
        operands.append(bia.reshape(-1, 1).astype(jnp.float32))
    operands.append(w_pred.reshape(-1, 1).astype(jnp.float32))   # (factor_num, 1)
    operands.append(b_pred.reshape(1, 1).astype(jnp.float32))    # (1, 1)

    grid = (b_pad // tile_b,)

    # Activation tiles stream over the batch; weights/biases are grid-invariant
    # (constant index_map -> loaded once, resident in VMEM).
    in_specs = [
        pl.BlockSpec((emb, tile_b), lambda i: (0, i)),
        pl.BlockSpec((emb, tile_b), lambda i: (0, i)),
    ]
    for op in operands[2:]:
        in_specs.append(pl.BlockSpec(op.shape, lambda i: (0, 0)))

    out_specs = pl.BlockSpec((1, tile_b), lambda i: (0, i))     # lane-dense store

    # Advisory cost estimate so XLA can overlap the gather glue with the kernel.
    flops = 2 * b_pad * w_pred.size
    for wgt in mlp_weights:
        flops += 2 * b_pad * wgt.shape[0] * wgt.shape[1]
    bytes_accessed = int(
        (eu_t.size + ei_t.size) * eu_t.dtype.itemsize
        + sum(op.size * op.dtype.itemsize for op in operands[2:])
        + b_pad * 4)
    cost = pl.CostEstimate(flops=int(flops), transcendentals=int(b_pad),
                           bytes_accessed=bytes_accessed)

    kernel = functools.partial(_ncf_kernel, num_layers)

    out = pl.pallas_call(
        kernel,
        out_shape=jax.ShapeDtypeStruct((1, b_pad), jnp.float32),
        grid=grid,
        in_specs=in_specs,
        out_specs=out_specs,
        compiler_params=pltpu.CompilerParams(
            dimension_semantics=("parallel",)),   # v7x: shard batch tiles over 2 TCs
        cost_estimate=cost,
    )(*operands)

    return out.reshape(-1)[:batch]


def init_ncf_params(key, user_num, item_num, factor_num, num_layers):
    """Deterministic synthetic parameters (shapes match the torch module;
    embedding tables are stored feature-major, Linear weights torch-native (out, in))."""
    emb_dim = factor_num * 2 ** (num_layers - 1)
    keys = jax.random.split(key, 3 + 2 * num_layers)

    embed_user_t = 0.01 * jax.random.normal(keys[0], (emb_dim, user_num), jnp.float32)
    embed_item_t = 0.01 * jax.random.normal(keys[1], (emb_dim, item_num), jnp.float32)

    mlp_weights, mlp_biases = [], []
    for i in range(num_layers):
        in_size = factor_num * 2 ** (num_layers - i)
        out_size = in_size // 2
        scale = 1.0 / jnp.sqrt(jnp.float32(in_size))
        mlp_weights.append(jax.random.uniform(
            keys[2 + 2 * i], (out_size, in_size), jnp.float32, -scale, scale))
        mlp_biases.append(jax.random.uniform(
            keys[3 + 2 * i], (out_size,), jnp.float32, -scale, scale))

    scale = 1.0 / jnp.sqrt(jnp.float32(factor_num))
    w_pred = jax.random.uniform(keys[2 + 2 * num_layers], (1, factor_num),
                                jnp.float32, -scale, scale)
    b_pred = jnp.zeros((1,), jnp.float32)

    return dict(embed_user_t=embed_user_t, embed_item_t=embed_item_t,
                mlp_weights=mlp_weights, mlp_biases=mlp_biases,
                w_pred=w_pred, b_pred=b_pred)


def ncf_forward_ref(params, user_idx, item_idx):
    """Pure-JAX f32 reference mirroring the torch forward (gather -> cat -> MLP -> sigmoid)."""
    eu = params["embed_user_t"].T[user_idx]     # (B, emb)
    ei = params["embed_item_t"].T[item_idx]     # (B, emb)
    h = jnp.concatenate([eu, ei], axis=-1)
    for w, b in zip(params["mlp_weights"], params["mlp_biases"]):
        h = jnp.maximum(h @ w.T + b, 0.0)
    logit = h @ params["w_pred"].T + params["b_pred"]
    return jax.nn.sigmoid(logit).reshape(-1)


if __name__ == "__main__":
    user_num, item_num = 32, 48
    factor_num, num_layers = 8, 3          # emb_dim = 32, layer sizes 64->32->16->8->1
    batch = 300                            # non-multiple of 128: exercises tail padding

    key = jax.random.PRNGKey(0)
    kp, ku, ki = jax.random.split(key, 3)
    params = init_ncf_params(kp, user_num, item_num, factor_num, num_layers)

    user_idx = jax.random.randint(ku, (batch,), 0, user_num, dtype=jnp.int32)
    item_idx = jax.random.randint(ki, (batch,), 0, item_num, dtype=jnp.int32)

    # Small tile so the demo runs several pipelined grid steps (3 tiles of 128).
    fwd = jax.jit(functools.partial(ncf_forward, max_tile_b=128))
    out = jax.block_until_ready(fwd(params, user_idx, item_idx))

    ref = jax.block_until_ready(ncf_forward_ref(params, user_idx, item_idx))
    assert out.shape == (batch,)
    # bf16 dot inputs (f32 accumulation) vs pure-f32 reference -> loose tolerance.
    assert jnp.allclose(out, ref, atol=2e-2, rtol=2e-2), (out, ref)
    assert bool(jnp.all(jnp.isfinite(out)))

    print("KERNEL_OK")
</pallas_src>

<mosaic_0001>
module attributes {stable_mosaic.version = 11 : i64} {
  func.func @_ncf_kernel(%arg0: i32, %arg1: memref<32x128xbf16, #tpu.memory_space<vmem>>, %arg2: memref<32x128xbf16, #tpu.memory_space<vmem>>, %arg3: memref<32x32xbf16, #tpu.memory_space<vmem>>, %arg4: memref<32x32xbf16, #tpu.memory_space<vmem>>, %arg5: memref<32x1xf32, #tpu.memory_space<vmem>>, %arg6: memref<16x32xbf16, #tpu.memory_space<vmem>>, %arg7: memref<16x1xf32, #tpu.memory_space<vmem>>, %arg8: memref<8x16xbf16, #tpu.memory_space<vmem>>, %arg9: memref<8x1xf32, #tpu.memory_space<vmem>>, %arg10: memref<8x1xf32, #tpu.memory_space<vmem>>, %arg11: memref<1x1xf32, #tpu.memory_space<vmem>>, %arg12: memref<1x128xf32, #tpu.memory_space<vmem>>) attributes {dimension_semantics = [#tpu.dimension_semantics<parallel>], iteration_bounds = array<i64: 3>, scalar_prefetch = 0 : i64, scratch_operands = 0 : i64, tpu.core_type = #tpu.core_type<tc>, window_params = [{transform_indices = @transform_0, window_bounds = array<i64: 32, 128>}, {transform_indices = @transform_1, window_bounds = array<i64: 32, 128>}, {pipeline_mode = #tpu.pipeline_mode<synchronous>, transform_indices = @transform_2, window_bounds = array<i64: 32, 32>}, {pipeline_mode = #tpu.pipeline_mode<synchronous>, transform_indices = @transform_3, window_bounds = array<i64: 32, 32>}, {pipeline_mode = #tpu.pipeline_mode<synchronous>, transform_indices = @transform_4, window_bounds = array<i64: 32, 1>}, {pipeline_mode = #tpu.pipeline_mode<synchronous>, transform_indices = @transform_5, window_bounds = array<i64: 16, 32>}, {pipeline_mode = #tpu.pipeline_mode<synchronous>, transform_indices = @transform_6, window_bounds = array<i64: 16, 1>}, {pipeline_mode = #tpu.pipeline_mode<synchronous>, transform_indices = @transform_7, window_bounds = array<i64: 8, 16>}, {pipeline_mode = #tpu.pipeline_mode<synchronous>, transform_indices = @transform_8, window_bounds = array<i64: 8, 1>}, {pipeline_mode = #tpu.pipeline_mode<synchronous>, transform_indices = @transform_9, window_bounds = array<i64: 8, 1>}, {pipeline_mode = #tpu.pipeline_mode<synchronous>, transform_indices = @transform_10, window_bounds = array<i64: 1, 1>}, {transform_indices = @transform_11, window_bounds = array<i64: 1, 128>}]} {
    %c0 = arith.constant 0 : index
    %c0_0 = arith.constant 0 : index
    %0 = vector.load %arg3[%c0, %c0_0] : memref<32x32xbf16, #tpu.memory_space<vmem>>, vector<32x32xbf16>
    %c0_1 = arith.constant 0 : index
    %c0_2 = arith.constant 0 : index
    %1 = vector.load %arg4[%c0_1, %c0_2] : memref<32x32xbf16, #tpu.memory_space<vmem>>, vector<32x32xbf16>
    %c0_3 = arith.constant 0 : index
    %c0_4 = arith.constant 0 : index
    %2 = vector.load %arg5[%c0_3, %c0_4] : memref<32x1xf32, #tpu.memory_space<vmem>>, vector<32x1xf32>
    %c0_5 = arith.constant 0 : index
    %c0_6 = arith.constant 0 : index
    %3 = vector.load %arg1[%c0_5, %c0_6] : memref<32x128xbf16, #tpu.memory_space<vmem>>, vector<32x128xbf16>
    %cst = arith.constant dense<0.000000e+00> : vector<32x128xf32>
    %4 = tpu.matmul %0, %3, %cst {dimension_numbers = #tpu.dot_dimension_numbers<[1], [0], [0], [1], [0, 0, 1, 1], [], []>} : vector<32x32xbf16>, vector<32x128xbf16>, vector<32x128xf32> -> vector<32x128xf32>
    %c0_7 = arith.constant 0 : index
    %c0_8 = arith.constant 0 : index
    %5 = vector.load %arg2[%c0_7, %c0_8] : memref<32x128xbf16, #tpu.memory_space<vmem>>, vector<32x128xbf16>
    %cst_9 = arith.constant dense<0.000000e+00> : vector<32x128xf32>
    %6 = tpu.matmul %1, %5, %cst_9 {dimension_numbers = #tpu.dot_dimension_numbers<[1], [0], [0], [1], [0, 0, 1, 1], [], []>} : vector<32x32xbf16>, vector<32x128xbf16>, vector<32x128xf32> -> vector<32x128xf32>
    %7 = arith.addf %4, %6 : vector<32x128xf32>
    %8 = vector.broadcast %2 : vector<32x1xf32> to vector<32x128xf32>
    %9 = arith.addf %7, %8 : vector<32x128xf32>
    %cst_10 = arith.constant 0.000000e+00 : f32
    %10 = vector.broadcast %cst_10 : f32 to vector<32x128xf32>
    %11 = arith.maximumf %9, %10 : vector<32x128xf32>
    %c0_11 = arith.constant 0 : index
    %c0_12 = arith.constant 0 : index
    %12 = vector.load %arg6[%c0_11, %c0_12] : memref<16x32xbf16, #tpu.memory_space<vmem>>, vector<16x32xbf16>
    %c0_13 = arith.constant 0 : index
    %c0_14 = arith.constant 0 : index
    %13 = vector.load %arg7[%c0_13, %c0_14] : memref<16x1xf32, #tpu.memory_space<vmem>>, vector<16x1xf32>
    %14 = arith.truncf %11 : vector<32x128xf32> to vector<32x128xbf16>
    %cst_15 = arith.constant dense<0.000000e+00> : vector<16x128xf32>
    %15 = tpu.matmul %12, %14, %cst_15 {dimension_numbers = #tpu.dot_dimension_numbers<[1], [0], [0], [1], [0, 0, 1, 1], [], []>} : vector<16x32xbf16>, vector<32x128xbf16>, vector<16x128xf32> -> vector<16x128xf32>
    %16 = vector.broadcast %13 : vector<16x1xf32> to vector<16x128xf32>
    %17 = arith.addf %15, %16 : vector<16x128xf32>
    %cst_16 = arith.constant 0.000000e+00 : f32
    %18 = vector.broadcast %cst_16 : f32 to vector<16x128xf32>
    %19 = arith.maximumf %17, %18 : vector<16x128xf32>
    %c0_17 = arith.constant 0 : index
    %c0_18 = arith.constant 0 : index
    %20 = vector.load %arg8[%c0_17, %c0_18] : memref<8x16xbf16, #tpu.memory_space<vmem>>, vector<8x16xbf16>
    %c0_19 = arith.constant 0 : index
    %c0_20 = arith.constant 0 : index
    %21 = vector.load %arg9[%c0_19, %c0_20] : memref<8x1xf32, #tpu.memory_space<vmem>>, vector<8x1xf32>
    %22 = arith.truncf %19 : vector<16x128xf32> to vector<16x128xbf16>
    %cst_21 = arith.constant dense<0.000000e+00> : vector<8x128xf32>
    %23 = tpu.matmul %20, %22, %cst_21 {dimension_numbers = #tpu.dot_dimension_numbers<[1], [0], [0], [1], [0, 0, 1, 1], [], []>} : vector<8x16xbf16>, vector<16x128xbf16>, vector<8x128xf32> -> vector<8x128xf32>
    %24 = vector.broadcast %21 : vector<8x1xf32> to vector<8x128xf32>
    %25 = arith.addf %23, %24 : vector<8x128xf32>
    %cst_22 = arith.constant 0.000000e+00 : f32
    %26 = vector.broadcast %cst_22 : f32 to vector<8x128xf32>
    %27 = arith.maximumf %25, %26 : vector<8x128xf32>
    %c0_23 = arith.constant 0 : index
    %c0_24 = arith.constant 0 : index
    %28 = vector.load %arg10[%c0_23, %c0_24] : memref<8x1xf32, #tpu.memory_space<vmem>>, vector<8x1xf32>
    %c0_25 = arith.constant 0 : index
    %c0_26 = arith.constant 0 : index
    %29 = vector.load %arg11[%c0_25, %c0_26] : memref<1x1xf32, #tpu.memory_space<vmem>>, vector<1x1xf32>
    %30 = vector.broadcast %28 : vector<8x1xf32> to vector<8x128xf32>
    %31 = arith.mulf %27, %30 : vector<8x128xf32>
    %cst_27 = arith.constant dense<0.000000e+00> : vector<128xf32>
    %32 = vector.multi_reduction <add>, %31, %cst_27 [0] : vector<8x128xf32> to vector<128xf32>
    %33 = vector.shape_cast %32 : vector<128xf32> to vector<1x128xf32>
    %34 = vector.broadcast %29 : vector<1x1xf32> to vector<1x128xf32>
    %35 = arith.addf %33, %34 : vector<1x128xf32>
    %36 = arith.negf %35 : vector<1x128xf32>
    %37 = math.exp %36 : vector<1x128xf32>
    %cst_28 = arith.constant 1.000000e+00 : f32
    %38 = vector.broadcast %cst_28 : f32 to vector<1x128xf32>
    %39 = arith.addf %38, %37 : vector<1x128xf32>
    %40 = arith.divf %38, %39 : vector<1x128xf32>
    %c0_29 = arith.constant 0 : index
    %c0_30 = arith.constant 0 : index
    %41 = vector.load %arg12[%c0_29, %c0_30] : memref<1x128xf32, #tpu.memory_space<vmem>>, vector<1x128xf32>
    tpu.vector_store %arg12[%c0_29, %c0_30], %40 {strides = array<i32>} : memref<1x128xf32, #tpu.memory_space<vmem>>, vector<1x128xf32>,
    return
  }
  func.func @transform_0(%arg0: i32) -> (i32, i32) {
    %c0_i32 = arith.constant 0 : i32
    %c0_i32_0 = arith.constant 0 : i32
    return %c0_i32, %arg0 : i32, i32
  }
  func.func @transform_1(%arg0: i32) -> (i32, i32) {
    %c0_i32 = arith.constant 0 : i32
    %c0_i32_0 = arith.constant 0 : i32
    return %c0_i32, %arg0 : i32, i32
  }
  func.func @transform_2(%arg0: i32) -> (i32, i32) {
    %c0_i32 = arith.constant 0 : i32
    %c0_i32_0 = arith.constant 0 : i32
    %c0_i32_1 = arith.constant 0 : i32
    return %c0_i32, %c0_i32_0 : i32, i32
  }
  func.func @transform_3(%arg0: i32) -> (i32, i32) {
    %c0_i32 = arith.constant 0 : i32
    %c0_i32_0 = arith.constant 0 : i32
    %c0_i32_1 = arith.constant 0 : i32
    return %c0_i32, %c0_i32_0 : i32, i32
  }
  func.func @transform_4(%arg0: i32) -> (i32, i32) {
    %c0_i32 = arith.constant 0 : i32
    %c0_i32_0 = arith.constant 0 : i32
    %c0_i32_1 = arith.constant 0 : i32
    return %c0_i32, %c0_i32_0 : i32, i32
  }
  func.func @transform_5(%arg0: i32) -> (i32, i32) {
    %c0_i32 = arith.constant 0 : i32
    %c0_i32_0 = arith.constant 0 : i32
    %c0_i32_1 = arith.constant 0 : i32
    return %c0_i32, %c0_i32_0 : i32, i32
  }
  func.func @transform_6(%arg0: i32) -> (i32, i32) {
    %c0_i32 = arith.constant 0 : i32
    %c0_i32_0 = arith.constant 0 : i32
    %c0_i32_1 = arith.constant 0 : i32
    return %c0_i32, %c0_i32_0 : i32, i32
  }
  func.func @transform_7(%arg0: i32) -> (i32, i32) {
    %c0_i32 = arith.constant 0 : i32
    %c0_i32_0 = arith.constant 0 : i32
    %c0_i32_1 = arith.constant 0 : i32
    return %c0_i32, %c0_i32_0 : i32, i32
  }
  func.func @transform_8(%arg0: i32) -> (i32, i32) {
    %c0_i32 = arith.constant 0 : i32
    %c0_i32_0 = arith.constant 0 : i32
    %c0_i32_1 = arith.constant 0 : i32
    return %c0_i32, %c0_i32_0 : i32, i32
  }
  func.func @transform_9(%arg0: i32) -> (i32, i32) {
    %c0_i32 = arith.constant 0 : i32
    %c0_i32_0 = arith.constant 0 : i32
    %c0_i32_1 = arith.constant 0 : i32
    return %c0_i32, %c0_i32_0 : i32, i32
  }
  func.func @transform_10(%arg0: i32) -> (i32, i32) {
    %c0_i32 = arith.constant 0 : i32
    %c0_i32_0 = arith.constant 0 : i32
    %c0_i32_1 = arith.constant 0 : i32
    return %c0_i32, %c0_i32_0 : i32, i32
  }
  func.func @transform_11(%arg0: i32) -> (i32, i32) {
    %c0_i32 = arith.constant 0 : i32
    %c0_i32_0 = arith.constant 0 : i32
    return %c0_i32, %arg0 : i32, i32
  }
}

</mosaic_0001>

<llo_original>
// kernel: ncf_forward.1
$region0: #{ncf_forward.1}
  #allocation0 [shape = 'u32[]', space=smem, size = 0x4, offset = 0x4, fixed_abs, tag = 'smem constant byte address 0x4 - core index']
  #allocation1 [shape = 'u32[144,128]{1,0:T(1,128)}', space=vmem, size = 0x12000, scoped, tag = 'internal scratch']
  #allocation2 [shape = 'f32[1,1]{1,0:T(1,128)S(1)}', space=vmem, size = 0x200, scoped, tag = 'scoped memory for ncf_forward.1']
  %s0 = inlined_call_operand.vmem [shape: bf16[32,384], index: 0, kind: input, shape index: {}]
  %s1 = inlined_call_operand.vmem [shape: bf16[32,384], index: 1, kind: input, shape index: {}]
  %s2 = inlined_call_operand.vmem [shape: bf16[32,32], index: 2, kind: input, shape index: {}]
  %s3 = inlined_call_operand.vmem [shape: bf16[32,32], index: 3, kind: input, shape index: {}]
  %s4 = inlined_call_operand.vmem [shape: f32[32,1], index: 4, kind: input, shape index: {}]
  %s5 = inlined_call_operand.vmem [shape: bf16[16,32], index: 5, kind: input, shape index: {}]
  %s6 = inlined_call_operand.vmem [shape: f32[16,1], index: 6, kind: input, shape index: {}]
  %s7 = inlined_call_operand.vmem [shape: bf16[8,16], index: 7, kind: input, shape index: {}]
  %s8 = inlined_call_operand.vmem [shape: f32[8,1], index: 8, kind: input, shape index: {}]
  %s9 = inlined_call_operand.vmem [shape: f32[8,1], index: 9, kind: input, shape index: {}]
  %s10 = inlined_call_operand.<no memory space> [shape: f32[1,1], index: 10, kind: input, shape index: {}]
  %s11 = inlined_call_operand.vmem [shape: f32[1,384], index: 11, kind: output, shape index: {}]
  %s12 = sld [smem:[#allocation0]]
  $region159: #{ncf_forward.1} parent=0
    _
  %s14 = ssub.s32 1, %s12
  %s15 = scalar_select 0, %s14, %s12
  %v16 = vstv %s10
  %17 = vst [vmem:[#allocation2] sm:$0x1] %v16
  $region1: #{ncf_forward.1} parent=0
    #allocation3 [shape = 'u8[16384]{0}', space=vmem, size = 0x4000, scoped, tag = 'input window, operand 0']
    #allocation4 [shape = 'u8[16384]{0}', space=vmem, size = 0x4000, scoped, tag = 'input window, operand 1']
    loop: start=0, step=1, limit=5
    $region2: #{ncf_forward.1} parent=1 // loop_pre_header
      _
    $region3: #{ncf_forward.1} parent=1 // loop_header
      %s19 = sphi 0, %s23
      %p20 = scmp.ge.s32.totalorder %s19, 5
      %s29 = sphi 0, %s31
      %s32 = sphi 0, %s29
      %s33 = sphi 0, %s32
      %s49 = sphi 0, %s33
      %s55 = sphi 0, %s57
      %s58 = sphi 0, %s55
      %s59 = sphi 0, %s58
      %s75 = sphi 0, %s59
      %s79 = sphi 0, %s79
      %s81 = sphi 0, %s79
      %s82 = sphi 0, %s81
      %s96 = sphi 0, %s82
      %s100 = sphi 0, %s100
      %s102 = sphi 0, %s100
      %s103 = sphi 0, %s102
      %s117 = sphi 0, %s103
      %s121 = sphi 0, %s121
      %s123 = sphi 0, %s121
      %s124 = sphi 0, %s123
      %s138 = sphi 0, %s124
      %s142 = sphi 0, %s142
      %s144 = sphi 0, %s142
      %s145 = sphi 0, %s144
      %s159 = sphi 0, %s145
      %s163 = sphi 0, %s163
      %s165 = sphi 0, %s163
      %s166 = sphi 0, %s165
      %s180 = sphi 0, %s166
      %s184 = sphi 0, %s184
      %s186 = sphi 0, %s184
      %s187 = sphi 0, %s186
      %s201 = sphi 0, %s187
      %s205 = sphi 0, %s205
      %s207 = sphi 0, %s205
      %s208 = sphi 0, %s207
      %s222 = sphi 0, %s208
      %s226 = sphi 0, %s226
      %s228 = sphi 0, %s226
      %s229 = sphi 0, %s228
      %s243 = sphi 0, %s229
      %s247 = sphi 0, %s247
      %s249 = sphi 0, %s247
      %s250 = sphi 0, %s249
      %s264 = sphi 0, %s250
      %s270 = sphi 0, %s272
      %s273 = sphi 0, %s270
      %s274 = sphi 0, %s273
      %s290 = sphi 0, %s274
    $region4: #{ncf_forward.1} parent=1 // loop_header_branch
      %22 = sbr.rel (%p20) target = $region8
    $region5: #{ncf_forward.1} parent=1 // loop_body
      %s24 = ssub.s32 %s19, 1
      %s25 = ssub.s32 %s19, 2
      %s26 = sadd.s32 %s19, 1
      %s27 = ssub.s32 %s19, %s26
      %p28 = scmp.eq.s32.totalorder %s27, 0
      %s30 = sadd.s32 %s29, 1
      %s31 = scalar_select %p28, %s29, %s30
      %p34 = pneg %p28
      %p35 = scmp.eq.s32.totalorder %s19, 2
      %p36 = por %p34, %p35
      %p37 = scmp.ne.s32.totalorder %s29, %s32
      %p38 = scmp.eq.s32.totalorder %s19, 0
      %p39 = por %p37, %p38
      %p40 = scmp.ne.s32.totalorder %s29, %s32
      %p41 = scmp.eq.s32.totalorder %s24, 2
      %p42 = por %p40, %p41
      %p43 = scmp.ne.s32.totalorder %s32, %s33
      %p44 = scmp.eq.s32.totalorder %s24, 0
      %p45 = por %p43, %p44
      %p46 = scmp.ne.s32.totalorder %s32, %s33
      %p47 = scmp.eq.s32.totalorder %s25, 2
      %p48 = por %p46, %p47
      %p50 = scmp.ne.s32.totalorder %s33, %s49
      %p51 = scmp.eq.s32.totalorder %s25, 0
      %p52 = por %p50, %p51
      %s53 = ssub.s32 %s19, %s26
      %p54 = scmp.eq.s32.totalorder %s53, 0
      %s56 = sadd.s32 %s55, 1
      %s57 = scalar_select %p54, %s55, %s56
      %p60 = pneg %p54
      %p61 = scmp.eq.s32.totalorder %s19, 2
      %p62 = por %p60, %p61
      %p63 = scmp.ne.s32.totalorder %s55, %s58
      %p64 = scmp.eq.s32.totalorder %s19, 0
      %p65 = por %p63, %p64
      %p66 = scmp.ne.s32.totalorder %s55, %s58
      %p67 = scmp.eq.s32.totalorder %s24, 2
      %p68 = por %p66, %p67
      %p69 = scmp.ne.s32.totalorder %s58, %s59
      %p70 = scmp.eq.s32.totalorder %s24, 0
      %p71 = por %p69, %p70
      %p72 = scmp.ne.s32.totalorder %s58, %s59
      %p73 = scmp.eq.s32.totalorder %s25, 2
      %p74 = por %p72, %p73
      %p76 = scmp.ne.s32.totalorder %s59, %s75
      %p77 = scmp.eq.s32.totalorder %s25, 0
      %p78 = por %p76, %p77
      %s80 = sadd.s32 %s79, 1
      %p83 = scmp.eq.s32.totalorder %s19, 2
      %p84 = scmp.ne.s32.totalorder %s79, %s81
      %p85 = scmp.eq.s32.totalorder %s19, 0
      %p86 = por %p84, %p85
      %p87 = scmp.ne.s32.totalorder %s79, %s81
      %p88 = scmp.eq.s32.totalorder %s24, 2
      %p89 = por %p87, %p88
      %p90 = scmp.ne.s32.totalorder %s81, %s82
      %p91 = scmp.eq.s32.totalorder %s24, 0
      %p92 = por %p90, %p91
      %p93 = scmp.ne.s32.totalorder %s81, %s82
      %p94 = scmp.eq.s32.totalorder %s25, 2
      %p95 = por %p93, %p94
      %p97 = scmp.ne.s32.totalorder %s82, %s96
      %p98 = scmp.eq.s32.totalorder %s25, 0
      %p99 = por %p97, %p98
      %s101 = sadd.s32 %s100, 1
      %p104 = scmp.eq.s32.totalorder %s19, 2
      %p105 = scmp.ne.s32.totalorder %s100, %s102
      %p106 = scmp.eq.s32.totalorder %s19, 0
      %p107 = por %p105, %p106
      %p108 = scmp.ne.s32.totalorder %s100, %s102
      %p109 = scmp.eq.s32.totalorder %s24, 2
      %p110 = por %p108, %p109
      %p111 = scmp.ne.s32.totalorder %s102, %s103
      %p112 = scmp.eq.s32.totalorder %s24, 0
      %p113 = por %p111, %p112
      %p114 = scmp.ne.s32.totalorder %s102, %s103
      %p115 = scmp.eq.s32.totalorder %s25, 2
      %p116 = por %p114, %p115
      %p118 = scmp.ne.s32.totalorder %s103, %s117
      %p119 = scmp.eq.s32.totalorder %s25, 0
      %p120 = por %p118, %p119
      %s122 = sadd.s32 %s121, 1
      %p125 = scmp.eq.s32.totalorder %s19, 2
      %p126 = scmp.ne.s32.totalorder %s121, %s123
      %p127 = scmp.eq.s32.totalorder %s19, 0
      %p128 = por %p126, %p127
      %p129 = scmp.ne.s32.totalorder %s121, %s123
      %p130 = scmp.eq.s32.totalorder %s24, 2
      %p131 = por %p129, %p130
      %p132 = scmp.ne.s32.totalorder %s123, %s124
      %p133 = scmp.eq.s32.totalorder %s24, 0
      %p134 = por %p132, %p133
      %p135 = scmp.ne.s32.totalorder %s123, %s124
      %p136 = scmp.eq.s32.totalorder %s25, 2
      %p137 = por %p135, %p136
      %p139 = scmp.ne.s32.totalorder %s124, %s138
      %p140 = scmp.eq.s32.totalorder %s25, 0
      %p141 = por %p139, %p140
      %s143 = sadd.s32 %s142, 1
      %p146 = scmp.eq.s32.totalorder %s19, 2
      %p147 = scmp.ne.s32.totalorder %s142, %s144
      %p148 = scmp.eq.s32.totalorder %s19, 0
      %p149 = por %p147, %p148
      %p150 = scmp.ne.s32.totalorder %s142, %s144
      %p151 = scmp.eq.s32.totalorder %s24, 2
      %p152 = por %p150, %p151
      %p153 = scmp.ne.s32.totalorder %s144, %s145
      %p154 = scmp.eq.s32.totalorder %s24, 0
      %p155 = por %p153, %p154
      %p156 = scmp.ne.s32.totalorder %s144, %s145
      %p157 = scmp.eq.s32.totalorder %s25, 2
      %p158 = por %p156, %p157
      %p160 = scmp.ne.s32.totalorder %s145, %s159
      %p161 = scmp.eq.s32.totalorder %s25, 0
      %p162 = por %p160, %p161
      %s164 = sadd.s32 %s163, 1
      %p167 = scmp.eq.s32.totalorder %s19, 2
      %p168 = scmp.ne.s32.totalorder %s163, %s165
      %p169 = scmp.eq.s32.totalorder %s19, 0
      %p170 = por %p168, %p169
      %p171 = scmp.ne.s32.totalorder %s163, %s165
      %p172 = scmp.eq.s32.totalorder %s24, 2
      %p173 = por %p171, %p172
      %p174 = scmp.ne.s32.totalorder %s165, %s166
      %p175 = scmp.eq.s32.totalorder %s24, 0
      %p176 = por %p174, %p175
      %p177 = scmp.ne.s32.totalorder %s165, %s166
      %p178 = scmp.eq.s32.totalorder %s25, 2
      %p179 = por %p177, %p178
      %p181 = scmp.ne.s32.totalorder %s166, %s180
      %p182 = scmp.eq.s32.totalorder %s25, 0
      %p183 = por %p181, %p182
      %s185 = sadd.s32 %s184, 1
      %p188 = scmp.eq.s32.totalorder %s19, 2
      %p189 = scmp.ne.s32.totalorder %s184, %s186
      %p190 = scmp.eq.s32.totalorder %s19, 0
      %p191 = por %p189, %p190
      %p192 = scmp.ne.s32.totalorder %s184, %s186
      %p193 = scmp.eq.s32.totalorder %s24, 2
      %p194 = por %p192, %p193
      %p195 = scmp.ne.s32.totalorder %s186, %s187
      %p196 = scmp.eq.s32.totalorder %s24, 0
      %p197 = por %p195, %p196
      %p198 = scmp.ne.s32.totalorder %s186, %s187
      %p199 = scmp.eq.s32.totalorder %s25, 2
      %p200 = por %p198, %p199
      %p202 = scmp.ne.s32.totalorder %s187, %s201
      %p203 = scmp.eq.s32.totalorder %s25, 0
      %p204 = por %p202, %p203
      %s206 = sadd.s32 %s205, 1
      %p209 = scmp.eq.s32.totalorder %s19, 2
      %p210 = scmp.ne.s32.totalorder %s205, %s207
      %p211 = scmp.eq.s32.totalorder %s19, 0
      %p212 = por %p210, %p211
      %p213 = scmp.ne.s32.totalorder %s205, %s207
      %p214 = scmp.eq.s32.totalorder %s24, 2
      %p215 = por %p213, %p214
      %p216 = scmp.ne.s32.totalorder %s207, %s208
      %p217 = scmp.eq.s32.totalorder %s24, 0
      %p218 = por %p216, %p217
      %p219 = scmp.ne.s32.totalorder %s207, %s208
      %p220 = scmp.eq.s32.totalorder %s25, 2
      %p221 = por %p219, %p220
      %p223 = scmp.ne.s32.totalorder %s208, %s222
      %p224 = scmp.eq.s32.totalorder %s25, 0
      %p225 = por %p223, %p224
      %s227 = sadd.s32 %s226, 1
      %p230 = scmp.eq.s32.totalorder %s19, 2
      %p231 = scmp.ne.s32.totalorder %s226, %s228
      %p232 = scmp.eq.s32.totalorder %s19, 0
      %p233 = por %p231, %p232
      %p234 = scmp.ne.s32.totalorder %s226, %s228
      %p235 = scmp.eq.s32.totalorder %s24, 2
      %p236 = por %p234, %p235
      %p237 = scmp.ne.s32.totalorder %s228, %s229
      %p238 = scmp.eq.s32.totalorder %s24, 0
      %p239 = por %p237, %p238
      %p240 = scmp.ne.s32.totalorder %s228, %s229
      %p241 = scmp.eq.s32.totalorder %s25, 2
      %p242 = por %p240, %p241
      %p244 = scmp.ne.s32.totalorder %s229, %s243
      %p245 = scmp.eq.s32.totalorder %s25, 0
      %p246 = por %p244, %p245
      %s248 = sadd.s32 %s247, 1
      %p251 = scmp.eq.s32.totalorder %s19, 2
      %p252 = scmp.ne.s32.totalorder %s247, %s249
      %p253 = scmp.eq.s32.totalorder %s19, 0
      %p254 = por %p252, %p253
      %p255 = scmp.ne.s32.totalorder %s247, %s249
      %p256 = scmp.eq.s32.totalorder %s24, 2
      %p257 = por %p255, %p256
      %p258 = scmp.ne.s32.totalorder %s249, %s250
      %p259 = scmp.eq.s32.totalorder %s24, 0
      %p260 = por %p258, %p259
      %p261 = scmp.ne.s32.totalorder %s249, %s250
      %p262 = scmp.eq.s32.totalorder %s25, 2
      %p263 = por %p261, %p262
      %p265 = scmp.ne.s32.totalorder %s250, %s264
      %p266 = scmp.eq.s32.totalorder %s25, 0
      %p267 = por %p265, %p266
      %s268 = ssub.s32 %s19, %s26
      %p269 = scmp.eq.s32.totalorder %s268, 0
      %s271 = sadd.s32 %s270, 1
      %s272 = scalar_select %p269, %s270, %s271
      %p275 = pneg %p269
      %p276 = scmp.eq.s32.totalorder %s19, 2
      %p277 = por %p275, %p276
      %p278 = scmp.ne.s32.totalorder %s270, %s273
      %p279 = scmp.eq.s32.totalorder %s19, 0
      %p280 = por %p278, %p279
      %p281 = scmp.ne.s32.totalorder %s270, %s273
      %p282 = scmp.eq.s32.totalorder %s24, 2
      %p283 = por %p281, %p282
      %p284 = scmp.ne.s32.totalorder %s273, %s274
      %p285 = scmp.eq.s32.totalorder %s24, 0
      %p286 = por %p284, %p285
      %p287 = scmp.ne.s32.totalorder %s273, %s274
      %p288 = scmp.eq.s32.totalorder %s25, 2
      %p289 = por %p287, %p288
      %p291 = scmp.ne.s32.totalorder %s274, %s290
      %p292 = scmp.eq.s32.totalorder %s25, 0
      %p293 = por %p291, %p292
      %p294 = scmp.le.s32.totalorder 1, %s19
      %p295 = scmp.lt.s32.totalorder %s19, 4
      %p296 = pnand %p294, %p295
      %p297 = pneg %p296
      // Predicated region
      $region9: #{ncf_forward.1} parent=5 // pred_check
        _
      $region10: #{ncf_forward.1} parent=5 // pred_check_branch
        %299 = sbr.rel (%p296) target = $region12
      $region11: #{ncf_forward.1} parent=5 // pred_region
        %s300 = ssub.s32 %s19, 1
        // Predicated region
        $region13: #{ncf_forward.1} parent=11 // pred_check
          %p301 = pneg %p92
        $region14: #{ncf_forward.1} parent=11 // pred_check_branch
          %303 = sbr.rel (%p301) target = $region16
        $region15: #{ncf_forward.1} parent=11 // pred_region
          _
        $region16: #{ncf_forward.1} parent=11 // pred_fallthru
          _
        // Predicated region
        $region17: #{ncf_forward.1} parent=11 // pred_check
          %p304 = pneg %p113
        $region18: #{ncf_forward.1} parent=11 // pred_check_branch
          %306 = sbr.rel (%p304) target = $region20
        $region19: #{ncf_forward.1} parent=11 // pred_region
          _
        $region20: #{ncf_forward.1} parent=11 // pred_fallthru
          _
        // Predicated region
        $region21: #{ncf_forward.1} parent=11 // pred_check
          %p307 = pneg %p134
        $region22: #{ncf_forward.1} parent=11 // pred_check_branch
          %309 = sbr.rel (%p307) target = $region24
        $region23: #{ncf_forward.1} parent=11 // pred_region
          _
        $region24: #{ncf_forward.1} parent=11 // pred_fallthru
          _
        // Predicated region
        $region25: #{ncf_forward.1} parent=11 // pred_check
          %p310 = pneg %p155
        $region26: #{ncf_forward.1} parent=11 // pred_check_branch
          %312 = sbr.rel (%p310) target = $region28
        $region27: #{ncf_forward.1} parent=11 // pred_region
          _
        $region28: #{ncf_forward.1} parent=11 // pred_fallthru
          _
        // Predicated region
        $region29: #{ncf_forward.1} parent=11 // pred_check
          %p313 = pneg %p176
        $region30: #{ncf_forward.1} parent=11 // pred_check_branch
          %315 = sbr.rel (%p313) target = $region32
        $region31: #{ncf_forward.1} parent=11 // pred_region
          _
        $region32: #{ncf_forward.1} parent=11 // pred_fallthru
          _
        // Predicated region
        $region33: #{ncf_forward.1} parent=11 // pred_check
          %p316 = pneg %p197
        $region34: #{ncf_forward.1} parent=11 // pred_check_branch
          %318 = sbr.rel (%p316) target = $region36
        $region35: #{ncf_forward.1} parent=11 // pred_region
          _
        $region36: #{ncf_forward.1} parent=11 // pred_fallthru
          _
        // Predicated region
        $region37: #{ncf_forward.1} parent=11 // pred_check
          %p319 = pneg %p218
        $region38: #{ncf_forward.1} parent=11 // pred_check_branch
          %321 = sbr.rel (%p319) target = $region40
        $region39: #{ncf_forward.1} parent=11 // pred_region
          _
        $region40: #{ncf_forward.1} parent=11 // pred_fallthru
          _
        // Predicated region
        $region41: #{ncf_forward.1} parent=11 // pred_check
          %p322 = pneg %p239
        $region42: #{ncf_forward.1} parent=11 // pred_check_branch
          %324 = sbr.rel (%p322) target = $region44
        $region43: #{ncf_forward.1} parent=11 // pred_region
          _
        $region44: #{ncf_forward.1} parent=11 // pred_fallthru
          _
        // Predicated region
        $region45: #{ncf_forward.1} parent=11 // pred_check
          %p325 = pneg %p260
        $region46: #{ncf_forward.1} parent=11 // pred_check_branch
          %327 = sbr.rel (%p325) target = $region48
        $region47: #{ncf_forward.1} parent=11 // pred_region
          _
        $region48: #{ncf_forward.1} parent=11 // pred_fallthru
          _
      $region12: #{ncf_forward.1} parent=5 // pred_fallthru
        _
      %p328 = scmp.lt.s32.totalorder %s19, 3
      // Predicated region
      $region49: #{ncf_forward.1} parent=5 // pred_check
        %p329 = pneg %p328
      $region50: #{ncf_forward.1} parent=5 // pred_check_branch
        %331 = sbr.rel (%p329) target = $region52
      $region51: #{ncf_forward.1} parent=5 // pred_region
        // Predicated region
        $region53: #{ncf_forward.1} parent=51 // pred_check
          %p332 = pneg %p39
        $region54: #{ncf_forward.1} parent=51 // pred_check_branch
          %334 = sbr.rel (%p332) target = $region56
        $region55: #{ncf_forward.1} parent=51 // pred_region
          %s335 = sand.u32 %s29, 1
          %s336 = sand.u32 %s29, 1
          %s337 = smul.addr %s336, 16
          %s338 = scalar_lea.vmem [#allocation3], %s337
          %s339 = smul.addr %s19, 4
          %s340 = scalar_lea.vmem %s0, %s339
          // Predicated region
          $region57: #{ncf_forward.1} parent=55 // pred_check
            _
          $region58: #{ncf_forward.1} parent=55 // pred_check_branch
            %342 = sbr.rel (0) target = $region60
          $region59: #{ncf_forward.1} parent=55 // pred_region
            // Predicated region
            $region61: #{ncf_forward.1} parent=59 // pred_check
              _
            $region62: #{ncf_forward.1} parent=59 // pred_check_branch
              %344 = sbr.rel target = $region64
            $region63: #{ncf_forward.1} parent=59 // pred_region
              // Predicated region
              $region76: #{ncf_forward.1} parent=63 // pred_check
                _
              $region77: #{ncf_forward.1} parent=63 // pred_check_branch
                %365 = sbr.rel (0) target = $region79
              $region78: #{ncf_forward.1} parent=63 // pred_region
                loop: start=0, step=1, limit=1
                $region80: #{ncf_forward.1} parent=78 // loop_pre_header
                  _
                $region81: #{ncf_forward.1} parent=78 // loop_header
                  %s367 = sphi 0, %s371
                  %p368 = scmp.ge.s32.totalorder %s367, 1
                  %s372 = sphi %s340, %s340
                  %s373 = sphi %s338, %s338
                $region82: #{ncf_forward.1} parent=78 // loop_header_branch
                  %370 = sbr.rel (%p368) target = $region86
                $region83: #{ncf_forward.1} parent=78 // loop_body
                  _
                $region84: #{ncf_forward.1} parent=78 // loop_footer
                  %s371 = sadd.s32 1, %s367
                $region85: #{ncf_forward.1} parent=78 // loop_footer_branch
                  %366 = sbr.rel target = $region81
                $region86: #{ncf_forward.1} parent=78 // loop_exit
                  _
                loop: start=0, step=1, limit=1
                $region87: #{ncf_forward.1} parent=78 // loop_pre_header
                  _
                $region88: #{ncf_forward.1} parent=78 // loop_header
                  %s376 = sphi 0, %s380
                  %p377 = scmp.ge.s32.totalorder %s376, 1
                  %s381 = sphi %s340, %s340
                  %s382 = sphi %s338, %s338
                $region89: #{ncf_forward.1} parent=78 // loop_header_branch
                  %379 = sbr.rel (%p377) target = $region93
                $region90: #{ncf_forward.1} parent=78 // loop_body
                  %v383 = vld [vmem:[%s381] sm:$0xf]
                  %384 = vst [vmem:[%s382] sm:$0xf] %v383
                  %v385 = vld [vmem:[%s381 + $0xc] sm:$0xf]
                  %386 = vst [vmem:[%s382 + $0x4] sm:$0xf] %v385
                  %v387 = vld [vmem:[%s381 + $0x18] sm:$0xf]
                  %388 = vst [vmem:[%s382 + $0x8] sm:$0xf] %v387
                  %v389 = vld [vmem:[%s381 + $0x24] sm:$0xf]
                  %390 = vst [vmem:[%s382 + $0xc] sm:$0xf] %v389
                $region91: #{ncf_forward.1} parent=78 // loop_footer
                  %s380 = sadd.s32 1, %s376
                $region92: #{ncf_forward.1} parent=78 // loop_footer_branch
                  %375 = sbr.rel target = $region88
                $region93: #{ncf_forward.1} parent=78 // loop_exit
                  _
              $region79: #{ncf_forward.1} parent=63 // pred_fallthru
                _
            $region64: #{ncf_forward.1} parent=59 // pred_fallthru
              _
            // Predicated region
            $region65: #{ncf_forward.1} parent=59 // pred_check
              _
            $region66: #{ncf_forward.1} parent=59 // pred_check_branch
              %346 = sbr.rel (0) target = $region68
            $region67: #{ncf_forward.1} parent=59 // pred_region
              loop: start=0, step=1, limit=1
              $region69: #{ncf_forward.1} parent=67 // loop_pre_header
                _
              $region70: #{ncf_forward.1} parent=67 // loop_header
                %s349 = sphi 0, %s353
                %p350 = scmp.ge.s32.totalorder %s349, 1
                %s354 = sphi %s340, %s340
                %s355 = sphi %s338, %s338
              $region71: #{ncf_forward.1} parent=67 // loop_header_branch
                %352 = sbr.rel (%p350) target = $region75
              $region72: #{ncf_forward.1} parent=67 // loop_body
                %v356 = vld [vmem:[%s354] sm:$0xf]
                %357 = vst [vmem:[%s355] sm:$0xf] %v356
                %v358 = vld [vmem:[%s354 + $0xc] sm:$0xf]
                %359 = vst [vmem:[%s355 + $0x4] sm:$0xf] %v358
                %v360 = vld [vmem:[%s354 + $0x18] sm:$0xf]
                %361 = vst [vmem:[%s355 + $0x8] sm:$0xf] %v360
                %v362 = vld [vmem:[%s354 + $0x24] sm:$0xf]
                %363 = vst [vmem:[%s355 + $0xc] sm:$0xf] %v362
              $region73: #{ncf_forward.1} parent=67 // loop_footer
                %s353 = sadd.s32 1, %s349
              $region74: #{ncf_forward.1} parent=67 // loop_footer_branch
                %348 = sbr.rel target = $region70
              $region75: #{ncf_forward.1} parent=67 // loop_exit
                _
            $region68: #{ncf_forward.1} parent=59 // pred_fallthru
              _
          $region60: #{ncf_forward.1} parent=55 // pred_fallthru
            _
          %391 = vnop
        $region56: #{ncf_forward.1} parent=51 // pred_fallthru
          _
        // Predicated region
        $region94: #{ncf_forward.1} parent=51 // pred_check
          %p392 = pneg %p65
        $region95: #{ncf_forward.1} parent=51 // pred_check_branch
          %394 = sbr.rel (%p392) target = $region97
        $region96: #{ncf_forward.1} parent=51 // pred_region
          %s395 = sand.u32 %s55, 1
          %s396 = sand.u32 %s55, 1
          %s397 = smul.addr %s396, 16
          %s398 = scalar_lea.vmem [#allocation4], %s397
          %s399 = smul.addr %s19, 4
          %s400 = scalar_lea.vmem %s1, %s399
          // Predicated region
          $region98: #{ncf_forward.1} parent=96 // pred_check
            _
          $region99: #{ncf_forward.1} parent=96 // pred_check_branch
            %402 = sbr.rel (0) target = $region101
          $region100: #{ncf_forward.1} parent=96 // pred_region
            // Predicated region
            $region102: #{ncf_forward.1} parent=100 // pred_check
              _
            $region103: #{ncf_forward.1} parent=100 // pred_check_branch
              %404 = sbr.rel target = $region105
            $region104: #{ncf_forward.1} parent=100 // pred_region
              // Predicated region
              $region117: #{ncf_forward.1} parent=104 // pred_check
                _
              $region118: #{ncf_forward.1} parent=104 // pred_check_branch
                %425 = sbr.rel (0) target = $region120
              $region119: #{ncf_forward.1} parent=104 // pred_region
                loop: start=0, step=1, limit=1
                $region121: #{ncf_forward.1} parent=119 // loop_pre_header
                  _
                $region122: #{ncf_forward.1} parent=119 // loop_header
                  %s427 = sphi 0, %s431
                  %p428 = scmp.ge.s32.totalorder %s427, 1
                  %s432 = sphi %s400, %s400
                  %s433 = sphi %s398, %s398
                $region123: #{ncf_forward.1} parent=119 // loop_header_branch
                  %430 = sbr.rel (%p428) target = $region127
                $region124: #{ncf_forward.1} parent=119 // loop_body
                  _
                $region125: #{ncf_forward.1} parent=119 // loop_footer
                  %s431 = sadd.s32 1, %s427
                $region126: #{ncf_forward.1} parent=119 // loop_footer_branch
                  %426 = sbr.rel target = $region122
                $region127: #{ncf_forward.1} parent=119 // loop_exit
                  _
                loop: start=0, step=1, limit=1
                $region128: #{ncf_forward.1} parent=119 // loop_pre_header
                  _
                $region129: #{ncf_forward.1} parent=119 // loop_header
                  %s436 = sphi 0, %s440
                  %p437 = scmp.ge.s32.totalorder %s436, 1
                  %s441 = sphi %s400, %s400
                  %s442 = sphi %s398, %s398
                $region130: #{ncf_forward.1} parent=119 // loop_header_branch
                  %439 = sbr.rel (%p437) target = $region134
                $region131: #{ncf_forward.1} parent=119 // loop_body
                  %v443 = vld [vmem:[%s441] sm:$0xf]
                  %444 = vst [vmem:[%s442] sm:$0xf] %v443
                  %v445 = vld [vmem:[%s441 + $0xc] sm:$0xf]
                  %446 = vst [vmem:[%s442 + $0x4] sm:$0xf] %v445
                  %v447 = vld [vmem:[%s441 + $0x18] sm:$0xf]
                  %448 = vst [vmem:[%s442 + $0x8] sm:$0xf] %v447
                  %v449 = vld [vmem:[%s441 + $0x24] sm:$0xf]
                  %450 = vst [vmem:[%s442 + $0xc] sm:$0xf] %v449
                $region132: #{ncf_forward.1} parent=119 // loop_footer
                  %s440 = sadd.s32 1, %s436
                $region133: #{ncf_forward.1} parent=119 // loop_footer_branch
                  %435 = sbr.rel target = $region129
                $region134: #{ncf_forward.1} parent=119 // loop_exit
                  _
              $region120: #{ncf_forward.1} parent=104 // pred_fallthru
                _
            $region105: #{ncf_forward.1} parent=100 // pred_fallthru
              _
            // Predicated region
            $region106: #{ncf_forward.1} parent=100 // pred_check
              _
            $region107: #{ncf_forward.1} parent=100 // pred_check_branch
              %406 = sbr.rel (0) target = $region109
            $region108: #{ncf_forward.1} parent=100 // pred_region
              loop: start=0, step=1, limit=1
              $region110: #{ncf_forward.1} parent=108 // loop_pre_header
                _
              $region111: #{ncf_forward.1} parent=108 // loop_header
                %s409 = sphi 0, %s413
                %p410 = scmp.ge.s32.totalorder %s409, 1
                %s414 = sphi %s400, %s400
                %s415 = sphi %s398, %s398
              $region112: #{ncf_forward.1} parent=108 // loop_header_branch
                %412 = sbr.rel (%p410) target = $region116
              $region113: #{ncf_forward.1} parent=108 // loop_body
                %v416 = vld [vmem:[%s414] sm:$0xf]
                %417 = vst [vmem:[%s415] sm:$0xf] %v416
                %v418 = vld [vmem:[%s414 + $0xc] sm:$0xf]
                %419 = vst [vmem:[%s415 + $0x4] sm:$0xf] %v418
                %v420 = vld [vmem:[%s414 + $0x18] sm:$0xf]
                %421 = vst [vmem:[%s415 + $0x8] sm:$0xf] %v420
                %v422 = vld [vmem:[%s414 + $0x24] sm:$0xf]
                %423 = vst [vmem:[%s415 + $0xc] sm:$0xf] %v422
              $region114: #{ncf_forward.1} parent=108 // loop_footer
                %s413 = sadd.s32 1, %s409
              $region115: #{ncf_forward.1} parent=108 // loop_footer_branch
                %408 = sbr.rel target = $region111
              $region116: #{ncf_forward.1} parent=108 // loop_exit
                _
            $region109: #{ncf_forward.1} parent=100 // pred_fallthru
              _
          $region101: #{ncf_forward.1} parent=96 // pred_fallthru
            _
          %451 = vnop
        $region97: #{ncf_forward.1} parent=51 // pred_fallthru
          _
      $region52: #{ncf_forward.1} parent=5 // pred_fallthru
        _
      %p452 = scmp.le.s32.totalorder 1, %s19
      %p453 = scmp.lt.s32.totalorder %s19, 4
      %p454 = pnand %p452, %p453
      %p455 = pneg %p454
      // Predicated region
      $region135: #{ncf_forward.1} parent=5 // pred_check
        _
      $region136: #{ncf_forward.1} parent=5 // pred_check_branch
        %457 = sbr.rel (%p454) target = $region138
      $region137: #{ncf_forward.1} parent=5 // pred_region
        %s458 = ssub.s32 %s19, 1
        %s459 = sand.u32 %s32, 1
        %s460 = sand.u32 %s32, 1
        %s461 = smul.addr %s460, 16
        %s462 = scalar_lea.vmem [#allocation3], %s461
        // Predicated region
        $region139: #{ncf_forward.1} parent=137 // pred_check
          %p463 = pneg %p45
        $region140: #{ncf_forward.1} parent=137 // pred_check_branch
          %465 = sbr.rel (%p463) target = $region142
        $region141: #{ncf_forward.1} parent=137 // pred_region
          _
        $region142: #{ncf_forward.1} parent=137 // pred_fallthru
          _
        %s466 = sand.u32 %s58, 1
        %s467 = sand.u32 %s58, 1
        %s468 = smul.addr %s467, 16
        %s469 = scalar_lea.vmem [#allocation4], %s468
        // Predicated region
        $region143: #{ncf_forward.1} parent=137 // pred_check
          %p470 = pneg %p71
        $region144: #{ncf_forward.1} parent=137 // pred_check_branch
          %472 = sbr.rel (%p470) target = $region146
        $region145: #{ncf_forward.1} parent=137 // pred_region
          _
        $region146: #{ncf_forward.1} parent=137 // pred_fallthru
          _
        %s473 = sand.u32 %s32, 1
        %s474 = sand.u32 %s32, 1
        %s475 = smul.addr %s474, 16
        %s476 = scalar_lea.vmem [#allocation3], %s475
        %p477 = pneg %p45
        %p478 = pneg %p42
        %s479 = sand.u32 %s58, 1
        %s480 = sand.u32 %s58, 1
        %s481 = smul.addr %s480, 16
        %s482 = scalar_lea.vmem [#allocation4], %s481
        %p483 = pneg %p71
        %p484 = pneg %p68
        %p485 = pneg %p92
        %p486 = pneg %p89
        %p487 = pneg %p113
        %p488 = pneg %p110
        %p489 = pneg %p134
        %p490 = pneg %p131
        %p491 = pneg %p155
        %p492 = pneg %p152
        %p493 = pneg %p176
        %p494 = pneg %p173
        %p495 = pneg %p197
        %p496 = pneg %p194
        %p497 = pneg %p218
        %p498 = pneg %p215
        %p499 = pneg %p239
        %p500 = pneg %p236
        %p501 = pneg %p260
        %p502 = pneg %p257
        %p503 = pneg %p286
        %p504 = pneg %p283
        %p505 = scmp.lt.s32.totalorder %s24, 2
        %s506 = scalar_select %p505, %s24, 2
        %s507 = scalar_lea.vmem %s11, %s506
        %p508 = scmp.lt.s32.totalorder %s24, 2
        %s509 = scalar_select %p508, %s24, 2
        %s510 = scalar_lea.vmem %s11, %s509
        %v512 = vld [vmem:[%s2] sm:$0xf]
        %v513 = vld [vmem:[%s2 + $0x4] sm:$0xf]
        %v514 = vld [vmem:[%s2 + $0x8] sm:$0xf]
        %v515 = vld [vmem:[%s2 + $0xc] sm:$0xf]
        %v516 = vld [vmem:[%s3] sm:$0xf]
        %v517 = vld [vmem:[%s3 + $0x4] sm:$0xf]
        %v518 = vld [vmem:[%s3 + $0x8] sm:$0xf]
        %v519 = vld [vmem:[%s3 + $0xc] sm:$0xf]
        %v520 = vld [vmem:[%s4] sm:$0xff]
        %v521 = vld [vmem:[%s4 + $0x8] sm:$0xff]
        %v522 = vld [vmem:[%s4 + $0x10] sm:$0xff]
        %v523 = vld [vmem:[%s4 + $0x18] sm:$0xff]
        %v524 = vld [vmem:[%s462] sm:$0xf]
        %v525 = vld [vmem:[%s462 + $0x4] sm:$0xf]
        %v526 = vld [vmem:[%s462 + $0x8] sm:$0xf]
        %v527 = vld [vmem:[%s462 + $0xc] sm:$0xf]
        %v528 = vld [vmem:[%s469] sm:$0xf]
        %v529 = vld [vmem:[%s469 + $0x4] sm:$0xf]
        %v530 = vld [vmem:[%s469 + $0x8] sm:$0xf]
        %v531 = vld [vmem:[%s469 + $0xc] sm:$0xf]
        %v536 = vunpack.c.l.b16 %v516
        %v537 = vunpack.c.l.b16 %v517
        %v538 = vunpack.c.l.b16 %v518
        %v539 = vunpack.c.l.b16 %v519
        %v540 = vpack.c.b16 %v537, %v536
        %v541 = vpack.c.b16 %v539, %v538
        %v546 = vunpack.c.l.b16 %v528
        %v547 = vunpack.c.l.b16 %v529
        %v548 = vunpack.c.l.b16 %v530
        %v549 = vunpack.c.l.b16 %v531
        %v550 = vpack.c.b16 %v547, %v546
        %v551 = vpack.c.b16 %v549, %v548
        %vm554 = vcmask 261120
        %v556 = vsel %vm554, %v540, 0
        %v559 = vsel %vm554, %v541, 0
        %561 = vmatprep.subr.bf16.mxu0 0
        %562 = vmatpush1.bf16.msra.mxu0 %v550
        %563 = vmatprep.subr.bf16.mxu0 0
        %564 = vmatpush1.bf16.msra.mxu0 %v551
        %565 = vmatprep.subr.bf16.mxu0 0
        %566 = vmatpush1.bf16.msra.mxu0 0
        %567 = vmatprep.subr.bf16.mxu0 0
        %568 = vmatpush1.bf16.msra.mxu0 0
        %569 = vmatprep.subr.bf16.mxu0 0
        %570 = vmatpush1.bf16.msra.mxu0 0
        %571 = vmatprep.subr.bf16.mxu0 0
        %572 = vmatpush1.bf16.msra.mxu0 0
        %573 = vmatprep.subr.bf16.mxu0 0
        %574 = vmatpush1.bf16.msra.mxu0 0
        %575 = vmatprep.subr.bf16.mxu0 0
        %576 = vmatpush1.bf16.msra.mxu0 0
        %577 = vmatprep.subr.bf16.mxu0 0
        %578 = vmatpush1.bf16.msra.mxu0 0
        %579 = vmatprep.subr.bf16.mxu0 0
        %580 = vmatpush1.bf16.msra.mxu0 0
        %581 = vmatprep.subr.bf16.mxu0 0
        %582 = vmatpush1.bf16.msra.mxu0 0
        %583 = vmatprep.subr.bf16.mxu0 0
        %584 = vmatpush1.bf16.msra.mxu0 0
        %585 = vmatprep.subr.bf16.mxu0 0
        %586 = vmatpush1.bf16.msra.mxu0 0
        %587 = vmatprep.subr.bf16.mxu0 0
        %588 = vmatpush1.bf16.msra.mxu0 0
        %589 = vmatprep.subr.bf16.mxu0 0
        %590 = vmatpush1.bf16.msra.mxu0 0
        %591 = vmatprep.subr.bf16.mxu0 0
        %592 = vmatpush1.bf16.msra.mxu0 0
        %593 = vmatprep.mubr.bf16.mxu0 0
        %594 = vmatmul.mubr.bf16.gmra.mrb[0].mxu0 %v556
        %v595 = vpop.f32.mrb[0].mxu0
        %v596 = vadd.f32 0.0, %v595
        %v597 = vpop.f32.mrb[0].mxu0
        %v598 = vpop.f32.mrb[0].mxu0
        %v599 = vadd.f32 0.0, %v598
        %v600 = vpop.f32.mrb[0].mxu0
        %601 = vmatprep.mubr.bf16.mxu0 0
        %602 = vmatmul.mubr.bf16.gmra.mrb[0].mxu0 %v559
        %v603 = vpop.f32.mrb[0].mxu0
        %v604 = vadd.f32 0.0, %v603
        %v605 = vpop.f32.mrb[0].mxu0
        %v606 = vpop.f32.mrb[0].mxu0
        %v607 = vadd.f32 0.0, %v606
        %v608 = vpop.f32.mrb[0].mxu0
        %609 = vdwg.mxu0
        %v614 = vunpack.c.l.b16 %v512
        %v615 = vunpack.c.l.b16 %v513
        %v616 = vunpack.c.l.b16 %v514
        %v617 = vunpack.c.l.b16 %v515
        %v618 = vpack.c.b16 %v615, %v614
        %v619 = vpack.c.b16 %v617, %v616
        %v624 = vunpack.c.l.b16 %v524
        %v625 = vunpack.c.l.b16 %v525
        %v626 = vunpack.c.l.b16 %v526
        %v627 = vunpack.c.l.b16 %v527
        %v628 = vpack.c.b16 %v625, %v624
        %v629 = vpack.c.b16 %v627, %v626
        %v633 = vsel %vm554, %v618, 0
        %v636 = vsel %vm554, %v619, 0
        %638 = vmatprep.subr.bf16.mxu0 0
        %639 = vmatpush1.bf16.msra.mxu0 %v628
        %640 = vmatprep.subr.bf16.mxu0 0
        %641 = vmatpush1.bf16.msra.mxu0 %v629
        %642 = vmatprep.subr.bf16.mxu0 0
        %643 = vmatpush1.bf16.msra.mxu0 0
        %644 = vmatprep.subr.bf16.mxu0 0
        %645 = vmatpush1.bf16.msra.mxu0 0
        %646 = vmatprep.subr.bf16.mxu0 0
        %647 = vmatpush1.bf16.msra.mxu0 0
        %648 = vmatprep.subr.bf16.mxu0 0
        %649 = vmatpush1.bf16.msra.mxu0 0
        %650 = vmatprep.subr.bf16.mxu0 0
        %651 = vmatpush1.bf16.msra.mxu0 0
        %652 = vmatprep.subr.bf16.mxu0 0
        %653 = vmatpush1.bf16.msra.mxu0 0
        %654 = vmatprep.subr.bf16.mxu0 0
        %655 = vmatpush1.bf16.msra.mxu0 0
        %656 = vmatprep.subr.bf16.mxu0 0
        %657 = vmatpush1.bf16.msra.mxu0 0
        %658 = vmatprep.subr.bf16.mxu0 0
        %659 = vmatpush1.bf16.msra.mxu0 0
        %660 = vmatprep.subr.bf16.mxu0 0
        %661 = vmatpush1.bf16.msra.mxu0 0
        %662 = vmatprep.subr.bf16.mxu0 0
        %663 = vmatpush1.bf16.msra.mxu0 0
        %664 = vmatprep.subr.bf16.mxu0 0
        %665 = vmatpush1.bf16.msra.mxu0 0
        %666 = vmatprep.subr.bf16.mxu0 0
        %667 = vmatpush1.bf16.msra.mxu0 0
        %668 = vmatprep.subr.bf16.mxu0 0
        %669 = vmatpush1.bf16.msra.mxu0 0
        %670 = vmatprep.mubr.bf16.mxu0 0
        %671 = vmatmul.mubr.bf16.gmra.mrb[0].mxu0 %v633
        %v672 = vpop.f32.mrb[0].mxu0
        %v673 = vadd.f32 %v596, %v672
        %v674 = vpop.f32.mrb[0].mxu0
        %v675 = vpop.f32.mrb[0].mxu0
        %v676 = vadd.f32 %v599, %v675
        %v677 = vpop.f32.mrb[0].mxu0
        %678 = vmatprep.mubr.bf16.mxu0 0
        %679 = vmatmul.mubr.bf16.gmra.mrb[0].mxu0 %v636
        %v680 = vpop.f32.mrb[0].mxu0
        %v681 = vadd.f32 %v604, %v680
        %v682 = vpop.f32.mrb[0].mxu0
        %v683 = vpop.f32.mrb[0].mxu0
        %v684 = vadd.f32 %v607, %v683
        %v685 = vpop.f32.mrb[0].mxu0
        %686 = vdwg.mxu0
        %688 = vset.pattern.permute.xlu0 0
        %689 = vperm.xlu0 %688, %v520
        %v690 = vpop.permute.xlu0 %689
        %693 = vset.pattern.permute.xlu0 0
        %694 = vperm.xlu0 %693, %v521
        %v695 = vpop.permute.xlu0 %694
        %698 = vset.pattern.permute.xlu0 0
        %699 = vperm.xlu0 %698, %v522
        %v700 = vpop.permute.xlu0 %699
        %703 = vset.pattern.permute.xlu0 0
        %704 = vperm.xlu0 %703, %v523
        %v705 = vpop.permute.xlu0 %704
        %v707 = vadd.f32 %v673, %v690
        %v708 = vadd.f32 %v676, %v695
        %v709 = vadd.f32 %v681, %v700
        %v710 = vadd.f32 %v684, %v705
        %v711 = vmax.f32 %v707, 0.0
        %v712 = vmax.f32 %v708, 0.0
        %v713 = vmax.f32 %v709, 0.0
        %v714 = vmax.f32 %v710, 0.0
        %v715 = vld [vmem:[%s5] sm:$0xf]
        %v716 = vld [vmem:[%s5 + $0x4] sm:$0xf]
        %v717 = vld [vmem:[%s6] sm:$0xff]
        %v718 = vld [vmem:[%s6 + $0x8] sm:$0xff]
        %v719 = vpack.c.bf16 %v712, %v711
        %v720 = vpack.c.bf16 %v714, %v713
        %722 = vset.pattern.permute.xlu0 0
        %723 = vperm.xlu0 %722, %v717
        %v724 = vpop.permute.xlu0 %723
        %727 = vset.pattern.permute.xlu0 0
        %728 = vperm.xlu0 %727, %v718
        %v729 = vpop.permute.xlu0 %728
        %v733 = vunpack.c.l.b16 %v715
        %v734 = vunpack.c.l.b16 %v716
        %v735 = vpack.c.b16 %v734, %v733
        %v737 = vsel %vm554, %v735, 0
        %739 = vmatprep.subr.bf16.mxu0 0
        %740 = vmatpush1.bf16.msra.mxu0 %v719
        %741 = vmatprep.subr.bf16.mxu0 0
        %742 = vmatpush1.bf16.msra.mxu0 %v720
        %743 = vmatprep.subr.bf16.mxu0 0
        %744 = vmatpush1.bf16.msra.mxu0 0
        %745 = vmatprep.subr.bf16.mxu0 0
        %746 = vmatpush1.bf16.msra.mxu0 0
        %747 = vmatprep.subr.bf16.mxu0 0
        %748 = vmatpush1.bf16.msra.mxu0 0
        %749 = vmatprep.subr.bf16.mxu0 0
        %750 = vmatpush1.bf16.msra.mxu0 0
        %751 = vmatprep.subr.bf16.mxu0 0
        %752 = vmatpush1.bf16.msra.mxu0 0
        %753 = vmatprep.subr.bf16.mxu0 0
        %754 = vmatpush1.bf16.msra.mxu0 0
        %755 = vmatprep.subr.bf16.mxu0 0
        %756 = vmatpush1.bf16.msra.mxu0 0
        %757 = vmatprep.subr.bf16.mxu0 0
        %758 = vmatpush1.bf16.msra.mxu0 0
        %759 = vmatprep.subr.bf16.mxu0 0
        %760 = vmatpush1.bf16.msra.mxu0 0
        %761 = vmatprep.subr.bf16.mxu0 0
        %762 = vmatpush1.bf16.msra.mxu0 0
        %763 = vmatprep.subr.bf16.mxu0 0
        %764 = vmatpush1.bf16.msra.mxu0 0
        %765 = vmatprep.subr.bf16.mxu0 0
        %766 = vmatpush1.bf16.msra.mxu0 0
        %767 = vmatprep.subr.bf16.mxu0 0
        %768 = vmatpush1.bf16.msra.mxu0 0
        %769 = vmatprep.subr.bf16.mxu0 0
        %770 = vmatpush1.bf16.msra.mxu0 0
        %771 = vmatprep.mubr.bf16.mxu0 0
        %772 = vmatmul.mubr.bf16.gmra.mrb[0].mxu0 %v737
        %v773 = vpop.f32.mrb[0].mxu0
        %v774 = vadd.f32 %v724, %v773
        %v775 = vpop.f32.mrb[0].mxu0
        %v776 = vpop.f32.mrb[0].mxu0
        %v777 = vadd.f32 %v729, %v776
        %v778 = vpop.f32.mrb[0].mxu0
        %779 = vdwg.mxu0
        %v780 = vmax.f32 %v774, 0.0
        %v781 = vmax.f32 %v777, 0.0
        %v782 = vld [vmem:[%s7] sm:$0xf]
        %v783 = vld [vmem:[%s8] sm:$0xff]
        %v784 = vpack.c.bf16 %v781, %v780
        %786 = vset.pattern.permute.xlu0 0
        %787 = vperm.xlu0 %786, %v783
        %v788 = vpop.permute.xlu0 %787
        %vm790 = vcmask 130048
        %v792 = vsel %vm790, %v782, 0
        %794 = vmatprep.subr.bf16.mxu0 0
        %795 = vmatpush1.bf16.msra.mxu0 %v784
        %796 = vmatprep.subr.bf16.mxu0 0
        %797 = vmatpush1.bf16.msra.mxu0 0
        %798 = vmatprep.subr.bf16.mxu0 0
        %799 = vmatpush1.bf16.msra.mxu0 0
        %800 = vmatprep.subr.bf16.mxu0 0
        %801 = vmatpush1.bf16.msra.mxu0 0
        %802 = vmatprep.subr.bf16.mxu0 0
        %803 = vmatpush1.bf16.msra.mxu0 0
        %804 = vmatprep.subr.bf16.mxu0 0
        %805 = vmatpush1.bf16.msra.mxu0 0
        %806 = vmatprep.subr.bf16.mxu0 0
        %807 = vmatpush1.bf16.msra.mxu0 0
        %808 = vmatprep.subr.bf16.mxu0 0
        %809 = vmatpush1.bf16.msra.mxu0 0
        %810 = vmatprep.subr.bf16.mxu0 0
        %811 = vmatpush1.bf16.msra.mxu0 0
        %812 = vmatprep.subr.bf16.mxu0 0
        %813 = vmatpush1.bf16.msra.mxu0 0
        %814 = vmatprep.subr.bf16.mxu0 0
        %815 = vmatpush1.bf16.msra.mxu0 0
        %816 = vmatprep.subr.bf16.mxu0 0
        %817 = vmatpush1.bf16.msra.mxu0 0
        %818 = vmatprep.subr.bf16.mxu0 0
        %819 = vmatpush1.bf16.msra.mxu0 0
        %820 = vmatprep.subr.bf16.mxu0 0
        %821 = vmatpush1.bf16.msra.mxu0 0
        %822 = vmatprep.subr.bf16.mxu0 0
        %823 = vmatpush1.bf16.msra.mxu0 0
        %824 = vmatprep.subr.bf16.mxu0 0
        %825 = vmatpush1.bf16.msra.mxu0 0
        %826 = vmatprep.mubr.bf16.mxu0 0
        %827 = vmatmul.mubr.bf16.gmra.mrb[0].mxu0 %v792
        %v828 = vpop.f32.mrb[0].mxu0
        %v829 = vadd.f32 %v788, %v828
        %v830 = vpop.f32.mrb[0].mxu0
        %v831 = vpop.f32.mrb[0].mxu0
        %v832 = vpop.f32.mrb[0].mxu0
        %833 = vdwg.mxu0
        %v834 = vmax.f32 %v829, 0.0
        %v835 = vld [vmem:[%s9] sm:$0xff]
        %v836 = vld [vmem:[#allocation2] sm:$0x1]
        %838 = vset.pattern.permute.xlu0 0
        %839 = vperm.xlu0 %838, %v835
        %v840 = vpop.permute.xlu0 %839
        %v842 = vmul.f32 %v834, %v840
        %v843 = vrot.slane %v842, 4
        %v844 = vadd.f32 %v842, %v843
        %v845 = vrot.slane %v844, 2
        %v846 = vadd.f32 %v844, %v845
        %v847 = vrot.slane %v846, 1
        %v848 = vadd.f32 %v846, %v847
        %850 = vset.pattern.permute.xlu0 0
        %851 = vperm.xlu0 %850, %v836
        %v852 = vpop.permute.xlu0 %851
        %v854 = vlaneseq
        %v855 = vshrl.u32 %v854, 7
        %v856 = vsub.s32 0, %v855
        %v857 = vrot.slane %v852, %v856
        %v858 = vadd.f32 %v848, %v857
        %v859 = vxor.u32 %v858, 2147483648
        %v860 = vmul.f32 %v859, 1.442695
        %v861 = vpow.pop %v860
        %v862 = vadd.f32 %v861, 1.0
        %v863 = vrcp.pop %v862
        %v864 = vmul.f32 1.0, %v863
        %865 = vst [vmem:[%s510] sm:$0x1] %v864
        %p866 = scmp.lt.s32.totalorder %s24, 2
        %s867 = scalar_select %p866, %s24, 2
        %s868 = scalar_lea.vmem %s11, %s867
        // Predicated region
        $region147: #{ncf_forward.1} parent=137 // pred_check
          %p869 = pneg %p283
        $region148: #{ncf_forward.1} parent=137 // pred_check_branch
          %871 = sbr.rel (%p869) target = $region150
        $region149: #{ncf_forward.1} parent=137 // pred_region
          _
        $region150: #{ncf_forward.1} parent=137 // pred_fallthru
          _
      $region138: #{ncf_forward.1} parent=5 // pred_fallthru
        _
      %p872 = scmp.le.s32.totalorder 2, %s19
      // Predicated region
      $region151: #{ncf_forward.1} parent=5 // pred_check
        %p873 = pneg %p872
      $region152: #{ncf_forward.1} parent=5 // pred_check_branch
        %875 = sbr.rel (%p873) target = $region154
      $region153: #{ncf_forward.1} parent=5 // pred_region
        %s876 = ssub.s32 %s19, 2
        // Predicated region
        $region155: #{ncf_forward.1} parent=153 // pred_check
          %p877 = pneg %p289
        $region156: #{ncf_forward.1} parent=153 // pred_check_branch
          %879 = sbr.rel (%p877) target = $region158
        $region157: #{ncf_forward.1} parent=153 // pred_region
          %p880 = scmp.lt.s32.totalorder %s25, 2
          %s881 = scalar_select %p880, %s25, 2
          %s882 = scalar_lea.vmem %s11, %s881
        $region158: #{ncf_forward.1} parent=153 // pred_fallthru
          _
      $region154: #{ncf_forward.1} parent=5 // pred_fallthru
        _
    $region6: #{ncf_forward.1} parent=1 // loop_footer
      %s23 = sadd.s32 1, %s19
    $region7: #{ncf_forward.1} parent=1 // loop_footer_branch
      %18 = sbr.rel target = $region3
    $region8: #{ncf_forward.1} parent=1 // loop_exit
      _

</llo_original>
